<compile_context>
chip_gen: v7x
topology: tpu7x:2x2x1
jax: 0.10.0
libtpu: 0.0.40
codegen_flags: <defaults>
</compile_context>

<pallas_src>
import functools

import jax
import jax.numpy as jnp
from jax.experimental import pallas as pl
from jax.experimental.pallas import tpu as pltpu


_VMEM_LIMIT_BYTES = 48 * 1024 * 1024      # <= 64 MiB (v7x physical), fine on v5e/v6e
_WORKING_SET_BUDGET = 24 * 1024 * 1024    # double-buffered in + out blocks target


def _excitation(mean_f32, w1_f32, w2t_f32):
    """FC1 -> ReLU -> FC2 -> sigmoid on (1, C) channel means (VPU/XLU/EUP only)."""
    # FC1 + ReLU:  h1[j] = relu(sum_c mean[c] * w1[j, c])      -> (Cr, 1)
    h1 = jnp.maximum(jnp.sum(mean_f32 * w1_f32, axis=1, keepdims=True), 0.0)
    # FC2:         y[c]  = sum_j h1[j] * w2t[j, c]             -> (1, C)
    y = jnp.sum(h1 * w2t_f32, axis=0, keepdims=True)
    return jax.nn.sigmoid(y)                                   # (1, C) f32, EUP


# ----------------------------------------------------------------------------
# Fused kernel: pool + MLP + rescale in one HBM pass (full image resident)
# ----------------------------------------------------------------------------
def _se_fused_kernel(x_ref, w1_ref, w2t_ref, o_ref, *, inv_hw):
    xb = x_ref[...]                                            # (1, C, S), native dtype
    mean = jnp.sum(xb.astype(jnp.float32), axis=-1) * inv_hw   # (1, C) f32 accumulation
    s = _excitation(mean,
                    w1_ref[...].astype(jnp.float32),
                    w2t_ref[...].astype(jnp.float32))          # (1, C) f32
    s = s.astype(xb.dtype)                                     # multiply in input dtype
    o_ref[...] = (xb * s[:, :, None]).astype(o_ref.dtype)      # lane-broadcast rescale


# ----------------------------------------------------------------------------
# Fallback pass 1: tiled global average pool + excitation MLP -> (N, C, 1) scale
# ----------------------------------------------------------------------------
def _se_pool_mlp_kernel(x_ref, w1_ref, w2t_ref, scale_ref, acc_ref, *, inv_hw):
    j = pl.program_id(1)

    @pl.when(j == 0)
    def _init():
        acc_ref[...] = jnp.zeros_like(acc_ref)

    acc_ref[...] += jnp.sum(x_ref[...].astype(jnp.float32), axis=-1)   # (1, C)

    @pl.when(j == pl.num_programs(1) - 1)
    def _finalize():
        mean = acc_ref[...] * inv_hw                           # exact 1/(H*W)
        s = _excitation(mean,
                        w1_ref[...].astype(jnp.float32),
                        w2t_ref[...].astype(jnp.float32))      # (1, C)
        scale_ref[...] = s[:, :, None]                         # (1, C, 1)


# ----------------------------------------------------------------------------
# Fallback pass 2: vectorized channel-wise rescale (scale as a VMEM block)
# ----------------------------------------------------------------------------
def _se_scale_kernel(scale_ref, x_ref, o_ref):
    xb = x_ref[...]                                            # (1, C, TS)
    s = scale_ref[...].astype(xb.dtype)                        # (1, C, 1)
    o_ref[...] = (xb * s).astype(o_ref.dtype)                  # one broadcast vmul/vreg


def _pick_spatial_tile(s_total, c, itemsize, budget):
    """Largest lane-aligned (multiple of 128) divisor of H*W within the budget."""
    # Pass-2 working set ~ double-buffered input + output blocks of (C, TS).
    max_ts = budget // (4 * c * itemsize)
    if max_ts >= s_total:
        return s_total
    ts = (max_ts // 128) * 128
    while ts >= 128:
        if s_total % ts == 0:
            return ts
        ts -= 128
    # No lane-aligned divisor small enough: fall back to full spatial extent
    # (correct; may need a larger vmem limit for extreme shapes).
    return s_total


# ----------------------------------------------------------------------------
# Wrapper
# ----------------------------------------------------------------------------
def se_forward(x, w1, w2, *, force_two_pass=False,
               working_set_budget=_WORKING_SET_BUDGET):
    """SE forward.  x: (N, C, H, W); w1: (C//r, C); w2: (C, C//r)."""
    n, c, h, w = x.shape
    cr = w1.shape[0]
    assert w1.shape == (cr, c), w1.shape
    assert w2.shape == (c, cr), w2.shape

    s = h * w
    inv_hw = 1.0 / float(s)
    itemsize = jnp.dtype(x.dtype).itemsize

    # Lane-dense layout: spatial on lanes, channels on sublanes (free view).
    x3 = x.reshape(n, c, s)
    # Present w2 as (Cr, C) so the kernel needs no transposes (tiny, plain JAX).
    w2t = jnp.transpose(w2)

    compiler_params = dict(vmem_limit_bytes=_VMEM_LIMIT_BYTES)

    fused_working_set = 4 * c * s * itemsize    # 2x(in) + 2x(out) buffered blocks
    if (not force_two_pass) and fused_working_set <= working_set_budget:
        # --- single HBM pass: pool + MLP + rescale, one image per grid step ---
        out3 = pl.pallas_call(
            functools.partial(_se_fused_kernel, inv_hw=inv_hw),
            out_shape=jax.ShapeDtypeStruct((n, c, s), x.dtype),
            grid_spec=pltpu.PrefetchScalarGridSpec(
                num_scalar_prefetch=0,
                grid=(n,),
                in_specs=[
                    pl.BlockSpec((1, c, s), lambda i: (i, 0, 0)),
                    pl.BlockSpec((cr, c), lambda i: (0, 0)),
                    pl.BlockSpec((cr, c), lambda i: (0, 0)),
                ],
                out_specs=pl.BlockSpec((1, c, s), lambda i: (i, 0, 0)),
            ),
            compiler_params=pltpu.CompilerParams(
                dimension_semantics=("parallel",), **compiler_params),
        )(x3, w1, w2t)
        return out3.reshape(n, c, h, w)

    # --- tiled two-pass fallback (per-image slab too large for VMEM) ---------
    ts = _pick_spatial_tile(s, c, itemsize, working_set_budget)
    assert s % ts == 0
    n_s = s // ts

    # pass 1: pool + excitation MLP -> per-(n, c) scale, shape (N, C, 1)
    scale = pl.pallas_call(
        functools.partial(_se_pool_mlp_kernel, inv_hw=inv_hw),
        out_shape=jax.ShapeDtypeStruct((n, c, 1), jnp.float32),
        grid_spec=pltpu.PrefetchScalarGridSpec(
            num_scalar_prefetch=0,
            grid=(n, n_s),
            in_specs=[
                pl.BlockSpec((1, c, ts), lambda i, j: (i, 0, j)),
                pl.BlockSpec((cr, c), lambda i, j: (0, 0)),
                pl.BlockSpec((cr, c), lambda i, j: (0, 0)),
            ],
            out_specs=pl.BlockSpec((1, c, 1), lambda i, j: (i, 0, 0)),
            scratch_shapes=[pltpu.VMEM((1, c), jnp.float32)],
        ),
        compiler_params=pltpu.CompilerParams(
            dimension_semantics=("parallel", "arbitrary"), **compiler_params),
    )(x3, w1, w2t)

    # pass 2: vectorized rescale, both grid axes megacore-shardable
    out3 = pl.pallas_call(
        _se_scale_kernel,
        out_shape=jax.ShapeDtypeStruct((n, c, s), x.dtype),
        grid_spec=pltpu.PrefetchScalarGridSpec(
            num_scalar_prefetch=0,
            grid=(n, n_s),
            in_specs=[
                pl.BlockSpec((1, c, 1), lambda i, j: (i, 0, 0)),
                pl.BlockSpec((1, c, ts), lambda i, j: (i, 0, j)),
            ],
            out_specs=pl.BlockSpec((1, c, ts), lambda i, j: (i, 0, j)),
        ),
        compiler_params=pltpu.CompilerParams(
            dimension_semantics=("parallel", "parallel"), **compiler_params),
    )(scale, x3)
    return out3.reshape(n, c, h, w)


# ----------------------------------------------------------------------------
# Pure-JAX reference (mirrors the PyTorch module)
# ----------------------------------------------------------------------------
def se_reference(x, w1, w2):
    y = jnp.mean(x.astype(jnp.float32), axis=(2, 3))        # (N, C)
    y = jnp.maximum(y @ w1.T, 0.0)                           # (N, Cr)
    y = jax.nn.sigmoid(y @ w2.T)                             # (N, C)
    return (x * y[:, :, None, None].astype(x.dtype)).astype(x.dtype)


if __name__ == "__main__":
    key = jax.random.PRNGKey(0)
    kx, k1, k2 = jax.random.split(key, 3)

    N, C, H, W = 2, 32, 16, 16
    ratio = 16
    Cr = C // ratio                                           # 2

    x = jax.random.normal(kx, (N, C, H, W), dtype=jnp.float32)
    w1 = 0.2 * jax.random.normal(k1, (Cr, C), dtype=jnp.float32)
    w2 = 0.2 * jax.random.normal(k2, (C, Cr), dtype=jnp.float32)

    ref = se_reference(x, w1, w2)

    # 1) Fused single-HBM-pass path (default: per-image slab fits VMEM budget).
    out_fused = jax.block_until_ready(jax.jit(se_forward)(x, w1, w2))
    assert out_fused.shape == x.shape
    assert jnp.allclose(out_fused, ref, rtol=1e-5, atol=1e-5), float(
        jnp.max(jnp.abs(out_fused - ref)))

    # 2) Tiled two-pass fallback, forced with a tiny budget so H*W=256 splits
    #    into two 128-lane tiles — exercises the grid reduction + vectorized
    #    rescale path.
    se_tiled = jax.jit(functools.partial(
        se_forward, force_two_pass=True, working_set_budget=64 * 1024))
    out_tiled = jax.block_until_ready(se_tiled(x, w1, w2))
    assert jnp.allclose(out_tiled, ref, rtol=1e-5, atol=1e-5), float(
        jnp.max(jnp.abs(out_tiled - ref)))

    print("KERNEL_OK")
</pallas_src>

<mosaic_0001>
module attributes {stable_mosaic.version = 11 : i64} {
  func.func @_se_fused_kernel(%arg0: i32, %arg1: memref<1x32x256xf32, #tpu.memory_space<vmem>>, %arg2: memref<2x32xf32, #tpu.memory_space<vmem>>, %arg3: memref<2x32xf32, #tpu.memory_space<vmem>>, %arg4: memref<1x32x256xf32, #tpu.memory_space<vmem>>) attributes {dimension_semantics = [#tpu.dimension_semantics<parallel>], iteration_bounds = array<i64: 2>, scalar_prefetch = 0 : i64, scratch_operands = 0 : i64, tpu.core_type = #tpu.core_type<tc>, window_params = [{transform_indices = @transform_0, window_bounds = array<i64: 1, 32, 256>}, {pipeline_mode = #tpu.pipeline_mode<synchronous>, transform_indices = @transform_1, window_bounds = array<i64: 2, 32>}, {pipeline_mode = #tpu.pipeline_mode<synchronous>, transform_indices = @transform_2, window_bounds = array<i64: 2, 32>}, {transform_indices = @transform_3, window_bounds = array<i64: 1, 32, 256>}]} {
    %c0 = arith.constant 0 : index
    %c0_0 = arith.constant 0 : index
    %c0_1 = arith.constant 0 : index
    %0 = vector.load %arg1[%c0, %c0_0, %c0_1] : memref<1x32x256xf32, #tpu.memory_space<vmem>>, vector<1x32x256xf32>
    %cst = arith.constant dense<0.000000e+00> : vector<1x32xf32>
    %1 = vector.multi_reduction <add>, %0, %cst [2] : vector<1x32x256xf32> to vector<1x32xf32>
    %cst_2 = arith.constant 3.906250e-03 : f32
    %2 = vector.broadcast %cst_2 : f32 to vector<1x32xf32>
    %3 = arith.mulf %1, %2 : vector<1x32xf32>
    %c0_3 = arith.constant 0 : index
    %c0_4 = arith.constant 0 : index
    %4 = vector.load %arg2[%c0_3, %c0_4] : memref<2x32xf32, #tpu.memory_space<vmem>>, vector<2x32xf32>
    %c0_5 = arith.constant 0 : index
    %c0_6 = arith.constant 0 : index
    %5 = vector.load %arg3[%c0_5, %c0_6] : memref<2x32xf32, #tpu.memory_space<vmem>>, vector<2x32xf32>
    %6 = vector.broadcast %3 : vector<1x32xf32> to vector<2x32xf32>
    %7 = arith.mulf %6, %4 : vector<2x32xf32>
    %cst_7 = arith.constant dense<0.000000e+00> : vector<2xf32>
    %8 = vector.multi_reduction <add>, %7, %cst_7 [1] : vector<2x32xf32> to vector<2xf32>
    %9 = vector.shape_cast %8 : vector<2xf32> to vector<2x1xf32>
    %cst_8 = arith.constant 0.000000e+00 : f32
    %10 = vector.broadcast %cst_8 : f32 to vector<2x1xf32>
    %11 = arith.maximumf %9, %10 : vector<2x1xf32>
    %12 = vector.broadcast %11 : vector<2x1xf32> to vector<2x32xf32>
    %13 = arith.mulf %12, %5 : vector<2x32xf32>
    %cst_9 = arith.constant dense<0.000000e+00> : vector<32xf32>
    %14 = vector.multi_reduction <add>, %13, %cst_9 [0] : vector<2x32xf32> to vector<32xf32>
    %15 = vector.shape_cast %14 : vector<32xf32> to vector<1x32xf32>
    %16 = arith.negf %15 : vector<1x32xf32>
    %17 = math.exp %16 : vector<1x32xf32>
    %cst_10 = arith.constant 1.000000e+00 : f32
    %18 = vector.broadcast %cst_10 : f32 to vector<1x32xf32>
    %19 = arith.addf %18, %17 : vector<1x32xf32>
    %20 = arith.divf %18, %19 : vector<1x32xf32>
    %21 = vector.shape_cast %20 : vector<1x32xf32> to vector<1x32x1xf32>
    %22 = vector.broadcast %21 : vector<1x32x1xf32> to vector<1x32x256xf32>
    %23 = arith.mulf %0, %22 : vector<1x32x256xf32>
    %c0_11 = arith.constant 0 : index
    %c0_12 = arith.constant 0 : index
    %c0_13 = arith.constant 0 : index
    %24 = vector.load %arg4[%c0_11, %c0_12, %c0_13] : memref<1x32x256xf32, #tpu.memory_space<vmem>>, vector<1x32x256xf32>
    tpu.vector_store %arg4[%c0_11, %c0_12, %c0_13], %23 {strides = array<i32>} : memref<1x32x256xf32, #tpu.memory_space<vmem>>, vector<1x32x256xf32>,
    return
  }
  func.func @transform_0(%arg0: i32) -> (i32, i32, i32) {
    %c0_i32 = arith.constant 0 : i32
    %c0_i32_0 = arith.constant 0 : i32
    %c0_i32_1 = arith.constant 0 : i32
    return %arg0, %c0_i32, %c0_i32_0 : i32, i32, i32
  }
  func.func @transform_1(%arg0: i32) -> (i32, i32) {
    %c0_i32 = arith.constant 0 : i32
    %c0_i32_0 = arith.constant 0 : i32
    %c0_i32_1 = arith.constant 0 : i32
    return %c0_i32, %c0_i32_0 : i32, i32
  }
  func.func @transform_2(%arg0: i32) -> (i32, i32) {
    %c0_i32 = arith.constant 0 : i32
    %c0_i32_0 = arith.constant 0 : i32
    %c0_i32_1 = arith.constant 0 : i32
    return %c0_i32, %c0_i32_0 : i32, i32
  }
  func.func @transform_3(%arg0: i32) -> (i32, i32, i32) {
    %c0_i32 = arith.constant 0 : i32
    %c0_i32_0 = arith.constant 0 : i32
    %c0_i32_1 = arith.constant 0 : i32
    return %arg0, %c0_i32, %c0_i32_0 : i32, i32, i32
  }
}

</mosaic_0001>

<llo_original>
// kernel: se_forward.1
$region0: #{se_forward.1}
  #allocation0 [shape = 'u32[]', space=smem, size = 0x4, offset = 0x4, fixed_abs, tag = 'smem constant byte address 0x4 - core index']
  #allocation1 [shape = 'u32[144,128]{1,0:T(1,128)}', space=vmem, size = 0x12000, scoped, tag = 'internal scratch']
  %s0 = inlined_call_operand.vmem [shape: f32[2,32,256], index: 0, kind: input, shape index: {}]
  %s1 = inlined_call_operand.vmem [shape: f32[2,32], index: 1, kind: input, shape index: {}]
  %s2 = inlined_call_operand.vmem [shape: f32[2,32], index: 2, kind: input, shape index: {}]
  %s3 = inlined_call_operand.vmem [shape: f32[2,32,256], index: 3, kind: output, shape index: {}]
  %s4 = sld [smem:[#allocation0]]
  $region45: #{se_forward.1} parent=0
    _
  %s6 = ssub.s32 1, %s4
  %s7 = scalar_select 0, %s6, %s4
  loop: start=0, step=1, limit=4
  $region2: #{se_forward.1} parent=0 // loop_pre_header
    _
  $region3: #{se_forward.1} parent=0 // loop_header
    %s9 = sphi 0, %s13
    %p10 = scmp.ge.s32.totalorder %s9, 4
    %s19 = sphi 0, %s21
    %s22 = sphi 0, %s19
    %s23 = sphi 0, %s22
    %s39 = sphi 0, %s23
    %s43 = sphi 0, %s43
    %s45 = sphi 0, %s43
    %s46 = sphi 0, %s45
    %s60 = sphi 0, %s46
    %s64 = sphi 0, %s64
    %s66 = sphi 0, %s64
    %s67 = sphi 0, %s66
    %s81 = sphi 0, %s67
    %s87 = sphi 0, %s89
    %s90 = sphi 0, %s87
    %s91 = sphi 0, %s90
    %s107 = sphi 0, %s91
  $region4: #{se_forward.1} parent=0 // loop_header_branch
    %12 = sbr.rel (%p10) target = $region8
  $region5: #{se_forward.1} parent=0 // loop_body
    %s14 = ssub.s32 %s9, 1
    %s15 = ssub.s32 %s9, 2
    %s16 = sadd.s32 %s9, 1
    %s17 = ssub.s32 %s9, %s16
    %p18 = scmp.eq.s32.totalorder %s17, 0
    %s20 = sadd.s32 %s19, 1
    %s21 = scalar_select %p18, %s19, %s20
    %p24 = pneg %p18
    %p25 = scmp.eq.s32.totalorder %s9, 1
    %p26 = por %p24, %p25
    %p27 = scmp.ne.s32.totalorder %s19, %s22
    %p28 = scmp.eq.s32.totalorder %s9, 0
    %p29 = por %p27, %p28
    %p30 = scmp.ne.s32.totalorder %s19, %s22
    %p31 = scmp.eq.s32.totalorder %s14, 1
    %p32 = por %p30, %p31
    %p33 = scmp.ne.s32.totalorder %s22, %s23
    %p34 = scmp.eq.s32.totalorder %s14, 0
    %p35 = por %p33, %p34
    %p36 = scmp.ne.s32.totalorder %s22, %s23
    %p37 = scmp.eq.s32.totalorder %s15, 1
    %p38 = por %p36, %p37
    %p40 = scmp.ne.s32.totalorder %s23, %s39
    %p41 = scmp.eq.s32.totalorder %s15, 0
    %p42 = por %p40, %p41
    %s44 = sadd.s32 %s43, 1
    %p47 = scmp.eq.s32.totalorder %s9, 1
    %p48 = scmp.ne.s32.totalorder %s43, %s45
    %p49 = scmp.eq.s32.totalorder %s9, 0
    %p50 = por %p48, %p49
    %p51 = scmp.ne.s32.totalorder %s43, %s45
    %p52 = scmp.eq.s32.totalorder %s14, 1
    %p53 = por %p51, %p52
    %p54 = scmp.ne.s32.totalorder %s45, %s46
    %p55 = scmp.eq.s32.totalorder %s14, 0
    %p56 = por %p54, %p55
    %p57 = scmp.ne.s32.totalorder %s45, %s46
    %p58 = scmp.eq.s32.totalorder %s15, 1
    %p59 = por %p57, %p58
    %p61 = scmp.ne.s32.totalorder %s46, %s60
    %p62 = scmp.eq.s32.totalorder %s15, 0
    %p63 = por %p61, %p62
    %s65 = sadd.s32 %s64, 1
    %p68 = scmp.eq.s32.totalorder %s9, 1
    %p69 = scmp.ne.s32.totalorder %s64, %s66
    %p70 = scmp.eq.s32.totalorder %s9, 0
    %p71 = por %p69, %p70
    %p72 = scmp.ne.s32.totalorder %s64, %s66
    %p73 = scmp.eq.s32.totalorder %s14, 1
    %p74 = por %p72, %p73
    %p75 = scmp.ne.s32.totalorder %s66, %s67
    %p76 = scmp.eq.s32.totalorder %s14, 0
    %p77 = por %p75, %p76
    %p78 = scmp.ne.s32.totalorder %s66, %s67
    %p79 = scmp.eq.s32.totalorder %s15, 1
    %p80 = por %p78, %p79
    %p82 = scmp.ne.s32.totalorder %s67, %s81
    %p83 = scmp.eq.s32.totalorder %s15, 0
    %p84 = por %p82, %p83
    %s85 = ssub.s32 %s9, %s16
    %p86 = scmp.eq.s32.totalorder %s85, 0
    %s88 = sadd.s32 %s87, 1
    %s89 = scalar_select %p86, %s87, %s88
    %p92 = pneg %p86
    %p93 = scmp.eq.s32.totalorder %s9, 1
    %p94 = por %p92, %p93
    %p95 = scmp.ne.s32.totalorder %s87, %s90
    %p96 = scmp.eq.s32.totalorder %s9, 0
    %p97 = por %p95, %p96
    %p98 = scmp.ne.s32.totalorder %s87, %s90
    %p99 = scmp.eq.s32.totalorder %s14, 1
    %p100 = por %p98, %p99
    %p101 = scmp.ne.s32.totalorder %s90, %s91
    %p102 = scmp.eq.s32.totalorder %s14, 0
    %p103 = por %p101, %p102
    %p104 = scmp.ne.s32.totalorder %s90, %s91
    %p105 = scmp.eq.s32.totalorder %s15, 1
    %p106 = por %p104, %p105
    %p108 = scmp.ne.s32.totalorder %s91, %s107
    %p109 = scmp.eq.s32.totalorder %s15, 0
    %p110 = por %p108, %p109
    %p111 = scmp.le.s32.totalorder 1, %s9
    %p112 = scmp.lt.s32.totalorder %s9, 3
    %p113 = pnand %p111, %p112
    %p114 = pneg %p113
    // Predicated region
    $region9: #{se_forward.1} parent=5 // pred_check
      _
    $region10: #{se_forward.1} parent=5 // pred_check_branch
      %116 = sbr.rel (%p113) target = $region12
    $region11: #{se_forward.1} parent=5 // pred_region
      %s117 = ssub.s32 %s9, 1
      // Predicated region
      $region13: #{se_forward.1} parent=11 // pred_check
        %p118 = pneg %p56
      $region14: #{se_forward.1} parent=11 // pred_check_branch
        %120 = sbr.rel (%p118) target = $region16
      $region15: #{se_forward.1} parent=11 // pred_region
        _
      $region16: #{se_forward.1} parent=11 // pred_fallthru
        _
      // Predicated region
      $region17: #{se_forward.1} parent=11 // pred_check
        %p121 = pneg %p77
      $region18: #{se_forward.1} parent=11 // pred_check_branch
        %123 = sbr.rel (%p121) target = $region20
      $region19: #{se_forward.1} parent=11 // pred_region
        _
      $region20: #{se_forward.1} parent=11 // pred_fallthru
        _
    $region12: #{se_forward.1} parent=5 // pred_fallthru
      _
    %p124 = scmp.lt.s32.totalorder %s9, 2
    // Predicated region
    $region21: #{se_forward.1} parent=5 // pred_check
      %p125 = pneg %p124
    $region22: #{se_forward.1} parent=5 // pred_check_branch
      %127 = sbr.rel (%p125) target = $region24
    $region23: #{se_forward.1} parent=5 // pred_region
      // Predicated region
      $region25: #{se_forward.1} parent=23 // pred_check
        %p128 = pneg %p29
      $region26: #{se_forward.1} parent=23 // pred_check_branch
        %130 = sbr.rel (%p128) target = $region28
      $region27: #{se_forward.1} parent=23 // pred_region
        %p131 = scmp.lt.s32.totalorder %s9, 1
        %s132 = scalar_select %p131, %s9, 1
        %s133 = smul.addr %s132, 8
        %s134 = smul.addr %s133, 8
        %s135 = scalar_lea.vmem %s0, %s134
      $region28: #{se_forward.1} parent=23 // pred_fallthru
        _
    $region24: #{se_forward.1} parent=5 // pred_fallthru
      _
    %p136 = scmp.le.s32.totalorder 1, %s9
    %p137 = scmp.lt.s32.totalorder %s9, 3
    %p138 = pnand %p136, %p137
    %p139 = pneg %p138
    // Predicated region
    $region29: #{se_forward.1} parent=5 // pred_check
      _
    $region30: #{se_forward.1} parent=5 // pred_check_branch
      %141 = sbr.rel (%p138) target = $region32
    $region31: #{se_forward.1} parent=5 // pred_region
      %s142 = ssub.s32 %s9, 1
      %p143 = scmp.lt.s32.totalorder %s14, 1
      %s144 = scalar_select %p143, %s14, 1
      %s145 = smul.addr %s144, 8
      %s146 = smul.addr %s145, 8
      %s147 = scalar_lea.vmem %s0, %s146
      %p148 = pneg %p35
      %p149 = pneg %p32
      %p150 = pneg %p56
      %p151 = pneg %p53
      %p152 = pneg %p77
      %p153 = pneg %p74
      %p154 = pneg %p103
      %p155 = pneg %p100
      %p156 = scmp.lt.s32.totalorder %s14, 1
      %s157 = scalar_select %p156, %s14, 1
      %s158 = smul.addr %s157, 8
      %s159 = smul.addr %s158, 8
      %s160 = scalar_lea.vmem %s3, %s159
      %p161 = scmp.lt.s32.totalorder %s14, 1
      %s162 = scalar_select %p161, %s14, 1
      %s163 = smul.addr %s162, 8
      %s164 = smul.addr %s163, 8
      %s165 = scalar_lea.vmem %s0, %s164
      %p166 = scmp.lt.s32.totalorder %s14, 1
      %s167 = scalar_select %p166, %s14, 1
      %s168 = smul.addr %s167, 8
      %s169 = smul.addr %s168, 8
      %s170 = scalar_lea.vmem %s3, %s169
      %v171 = vld [vmem:[%s165] sm:$0xff]
      %v172 = vld [vmem:[%s165 + $0x8] sm:$0xff]
      %v173 = vld [vmem:[%s165 + $0x10] sm:$0xff]
      %v174 = vld [vmem:[%s165 + $0x18] sm:$0xff]
      %v175 = vld [vmem:[%s165 + $0x20] sm:$0xff]
      %v176 = vld [vmem:[%s165 + $0x28] sm:$0xff]
      %v177 = vld [vmem:[%s165 + $0x30] sm:$0xff]
      %v178 = vld [vmem:[%s165 + $0x38] sm:$0xff]
      %v179 = vadd.f32 %v171, %v172
      %180 = vadd.xlane.f32.xlu0 %v179
      %v181 = vpop.xlane.xlu0 %180
      %v182 = vadd.f32 %v173, %v174
      %183 = vadd.xlane.f32.xlu0 %v182
      %v184 = vpop.xlane.xlu0 %183
      %v185 = vadd.f32 %v175, %v176
      %186 = vadd.xlane.f32.xlu0 %v185
      %v187 = vpop.xlane.xlu0 %186
      %v188 = vadd.f32 %v177, %v178
      %189 = vadd.xlane.f32.xlu0 %v188
      %v190 = vpop.xlane.xlu0 %189
      %v191 = vmul.f32 %v181, 0.00390625
      %v192 = vmul.f32 %v184, 0.00390625
      %v193 = vmul.f32 %v187, 0.00390625
      %v194 = vmul.f32 %v190, 0.00390625
      %v195 = vld [vmem:[%s1] sm:$0x3]
      %v196 = vld [vmem:[%s2] sm:$0x3]
      %v198 = vlaneseq
      %v199 = vshrl.u32 %v198, 7
      %v200 = vsub.s32 0, %v199
      %v201 = vrot.slane %v195, %v200
      %203 = vbcast.lane.b32.xlu0 %v201, 256
      %v204 = vpop.permute.xlu0 %203
      %s206 = sor.u32 256, 8
      %207 = vbcast.lane.b32.xlu0 %v201, %s206
      %v208 = vpop.permute.xlu0 %207
      %s210 = sor.u32 256, 16
      %211 = vbcast.lane.b32.xlu0 %v201, %s210
      %v212 = vpop.permute.xlu0 %211
      %s214 = sor.u32 256, 24
      %215 = vbcast.lane.b32.xlu0 %v201, %s214
      %v216 = vpop.permute.xlu0 %215
      %v217 = vlaneseq
      %v218 = vshrl.u32 %v217, 7
      %v219 = vsub.s32 1, %v218
      %v220 = vrot.slane %v195, %v219
      %222 = vbcast.lane.b32.xlu0 %v220, 256
      %v223 = vpop.permute.xlu0 %222
      %s225 = sor.u32 256, 8
      %226 = vbcast.lane.b32.xlu0 %v220, %s225
      %v227 = vpop.permute.xlu0 %226
      %s229 = sor.u32 256, 16
      %230 = vbcast.lane.b32.xlu0 %v220, %s229
      %v231 = vpop.permute.xlu0 %230
      %s233 = sor.u32 256, 24
      %234 = vbcast.lane.b32.xlu0 %v220, %s233
      %v235 = vpop.permute.xlu0 %234
      %v244 = vmul.f32 %v191, %v204
      %v245 = vmul.f32 %v192, %v208
      %v246 = vmul.f32 %v193, %v212
      %v247 = vmul.f32 %v194, %v216
      %v248 = vmul.f32 %v191, %v223
      %v249 = vmul.f32 %v192, %v227
      %v250 = vmul.f32 %v193, %v231
      %v251 = vmul.f32 %v194, %v235
      %260 = vset.pattern.permute.xlu0 0
      %261 = vperm.xlu0 %260, %v244
      %v262 = vpop.permute.xlu0 %261
      %263 = vset.pattern.permute.xlu0 0
      %264 = vperm.xlu0 %263, %v245
      %v265 = vpop.permute.xlu0 %264
      %266 = vset.pattern.permute.xlu0 0
      %267 = vperm.xlu0 %266, %v246
      %v268 = vpop.permute.xlu0 %267
      %269 = vset.pattern.permute.xlu0 0
      %270 = vperm.xlu0 %269, %v247
      %v271 = vpop.permute.xlu0 %270
      %272 = vset.pattern.permute.xlu0 0
      %273 = vperm.xlu0 %272, %v248
      %v274 = vpop.permute.xlu0 %273
      %275 = vset.pattern.permute.xlu0 0
      %276 = vperm.xlu0 %275, %v249
      %v277 = vpop.permute.xlu0 %276
      %278 = vset.pattern.permute.xlu0 0
      %279 = vperm.xlu0 %278, %v250
      %v280 = vpop.permute.xlu0 %279
      %281 = vset.pattern.permute.xlu0 0
      %282 = vperm.xlu0 %281, %v251
      %v283 = vpop.permute.xlu0 %282
      %v284 = vlaneseq
      %v285 = vand.u32 %v284, 127
      %v286 = vlaneseq
      %v287 = vshrl.u32 %v286, 7
      %v288 = vsub.s32 %v285, %v287
      %v289 = vrot.slane %v262, %v288
      %v290 = vadd.s32 %v285, 4294967288
      %v291 = vlaneseq
      %v292 = vshrl.u32 %v291, 7
      %v293 = vsub.s32 %v290, %v292
      %v294 = vrot.slane %v265, %v293
      %vm295 = vcmask 130112
      %v296 = vsel %vm295, %v294, %v289
      %v297 = vadd.s32 %v285, 4294967280
      %v298 = vlaneseq
      %v299 = vshrl.u32 %v298, 7
      %v300 = vsub.s32 %v297, %v299
      %v301 = vrot.slane %v268, %v300
      %vm302 = vcmask 195712
      %v303 = vsel %vm302, %v301, %v296
      %v304 = vadd.s32 %v285, 4294967272
      %v305 = vlaneseq
      %v306 = vshrl.u32 %v305, 7
      %v307 = vsub.s32 %v304, %v306
      %v308 = vrot.slane %v271, %v307
      %vm309 = vcmask 261312
      %v310 = vsel %vm309, %v308, %v303
      %v311 = vlaneseq
      %v312 = vshrl.u32 %v311, 7
      %v313 = vsub.s32 %v285, %v312
      %v314 = vrot.slane %v274, %v313
      %v315 = vlaneseq
      %v316 = vshrl.u32 %v315, 7
      %v317 = vsub.s32 %v290, %v316
      %v318 = vrot.slane %v277, %v317
      %v319 = vsel %vm295, %v318, %v314
      %v320 = vlaneseq
      %v321 = vshrl.u32 %v320, 7
      %v322 = vsub.s32 %v297, %v321
      %v323 = vrot.slane %v280, %v322
      %v324 = vsel %vm302, %v323, %v319
      %v325 = vlaneseq
      %v326 = vshrl.u32 %v325, 7
      %v327 = vsub.s32 %v304, %v326
      %v328 = vrot.slane %v283, %v327
      %v329 = vsel %vm309, %v328, %v324
      %vm330 = vcmask 1041409
      %v331 = vsel %vm330, %v329, %v310
      %vm333 = vcmask 254976
      %v334 = vsel %vm333, %v331, 0.0
      %335 = vadd.xlane.f32.xlu0 %v334
      %v336 = vpop.xlane.xlu0 %335
      %v337 = vmax.f32 %v336, 0.0
      %v338 = vmul.f32 %v337, %v196
      %v339 = vsel %vm333, %v338, 0.0
      %v340 = vrot.slane %v339, 4
      %v341 = vadd.f32 %v339, %v340
      %v342 = vrot.slane %v341, 2
      %v343 = vadd.f32 %v341, %v342
      %v344 = vrot.slane %v343, 1
      %v345 = vadd.f32 %v343, %v344
      %v346 = vxor.u32 %v345, 2147483648
      %v347 = vmul.f32 %v346, 1.442695
      %v348 = vpow.pop %v347
      %v349 = vadd.f32 %v348, 1.0
      %v350 = vrcp.pop %v349
      %v351 = vmul.f32 1.0, %v350
      %353 = vbcast.lane.b32.xlu0 %v351, 256
      %v354 = vpop.permute.xlu0 %353
      %s356 = sor.u32 256, 8
      %357 = vbcast.lane.b32.xlu0 %v351, %s356
      %v358 = vpop.permute.xlu0 %357
      %s360 = sor.u32 256, 16
      %361 = vbcast.lane.b32.xlu0 %v351, %s360
      %v362 = vpop.permute.xlu0 %361
      %s364 = sor.u32 256, 24
      %365 = vbcast.lane.b32.xlu0 %v351, %s364
      %v366 = vpop.permute.xlu0 %365
      %v367 = vmul.f32 %v171, %v354
      %v368 = vmul.f32 %v172, %v354
      %v369 = vmul.f32 %v173, %v358
      %v370 = vmul.f32 %v174, %v358
      %v371 = vmul.f32 %v175, %v362
      %v372 = vmul.f32 %v176, %v362
      %v373 = vmul.f32 %v177, %v366
      %v374 = vmul.f32 %v178, %v366
      %375 = vst [vmem:[%s170] sm:$0xff] %v367
      %376 = vst [vmem:[%s170 + $0x8] sm:$0xff] %v368
      %377 = vst [vmem:[%s170 + $0x10] sm:$0xff] %v369
      %378 = vst [vmem:[%s170 + $0x18] sm:$0xff] %v370
      %379 = vst [vmem:[%s170 + $0x20] sm:$0xff] %v371
      %380 = vst [vmem:[%s170 + $0x28] sm:$0xff] %v372
      %381 = vst [vmem:[%s170 + $0x30] sm:$0xff] %v373
      %382 = vst [vmem:[%s170 + $0x38] sm:$0xff] %v374
      %p383 = scmp.lt.s32.totalorder %s14, 1
      %s384 = scalar_select %p383, %s14, 1
      %s385 = smul.addr %s384, 8
      %s386 = smul.addr %s385, 8
      %s387 = scalar_lea.vmem %s3, %s386
      // Predicated region
      $region33: #{se_forward.1} parent=31 // pred_check
        %p388 = pneg %p100
      $region34: #{se_forward.1} parent=31 // pred_check_branch
        %390 = sbr.rel (%p388) target = $region36
      $region35: #{se_forward.1} parent=31 // pred_region
        _
      $region36: #{se_forward.1} parent=31 // pred_fallthru
        _
    $region32: #{se_forward.1} parent=5 // pred_fallthru
      _
    %p391 = scmp.le.s32.totalorder 2, %s9
    // Predicated region
    $region37: #{se_forward.1} parent=5 // pred_check
      %p392 = pneg %p391
    $region38: #{se_forward.1} parent=5 // pred_check_branch
      %394 = sbr.rel (%p392) target = $region40
    $region39: #{se_forward.1} parent=5 // pred_region
      %s395 = ssub.s32 %s9, 2
      // Predicated region
      $region41: #{se_forward.1} parent=39 // pred_check
        %p396 = pneg %p106
      $region42: #{se_forward.1} parent=39 // pred_check_branch
        %398 = sbr.rel (%p396) target = $region44
      $region43: #{se_forward.1} parent=39 // pred_region
        %p399 = scmp.lt.s32.totalorder %s15, 1
        %s400 = scalar_select %p399, %s15, 1
        %s401 = smul.addr %s400, 8
        %s402 = smul.addr %s401, 8
        %s403 = scalar_lea.vmem %s3, %s402
      $region44: #{se_forward.1} parent=39 // pred_fallthru
        _
    $region40: #{se_forward.1} parent=5 // pred_fallthru
      _
  $region6: #{se_forward.1} parent=0 // loop_footer
    %s13 = sadd.s32 1, %s9
  $region7: #{se_forward.1} parent=0 // loop_footer_branch
    %8 = sbr.rel target = $region3
  $region8: #{se_forward.1} parent=0 // loop_exit
    _

</llo_original>
